<compile_context>
chip_gen: v6e
topology: v6e:2x2x1
jax: 0.10.0
libtpu: 0.0.40
codegen_flags: <defaults>
</compile_context>

<pallas_src>
import jax
import jax.numpy as jnp
from jax.experimental import pallas as pl
from jax.experimental.pallas import tpu as pltpu


# ---------------------------------------------------------------------------
# Kernel
# ---------------------------------------------------------------------------
def llama_mlp_kernel(x_ref, wg_ref, wu_ref, wd_ref, o_ref, acc_ref):
    """One (token-tile i, intermediate-tile j) step of down(silu(x@Wg)*(x@Wu)).

    x_ref : [tm, H]   token tile (resident across the I axis)
    wg_ref: [H, ti]   gate-weight column tile
    wu_ref: [H, ti]   up-weight column tile
    wd_ref: [ti, H]   down-weight row tile
    o_ref : [tm, H]   output tile (written on the last I step)
    acc_ref:[tm, H]   f32 accumulator scratch
    """
    j = pl.program_id(1)
    nj = pl.num_programs(1)

    @pl.when(j == 0)
    def _():
        acc_ref[...] = jnp.zeros_like(acc_ref)

    x = x_ref[...]
    # MXU matmuls in the operand dtype, f32 accumulation.
    gate = jnp.dot(x, wg_ref[...], preferred_element_type=jnp.float32)
    up = jnp.dot(x, wu_ref[...], preferred_element_type=jnp.float32)
    inter = (gate * jax.nn.sigmoid(gate)) * up            # silu(gate) * up, f32
    partial = jnp.dot(inter.astype(wd_ref.dtype), wd_ref[...],
                      preferred_element_type=jnp.float32)

    # Epilogue fusion: on the last I step write the output directly from
    # (acc + partial); saves one [tm, H] f32 accumulator store+reload.
    @pl.when(j < nj - 1)
    def _():
        acc_ref[...] += partial

    @pl.when(j == nj - 1)
    def _():
        o_ref[...] = (acc_ref[...] + partial).astype(o_ref.dtype)


# ---------------------------------------------------------------------------
# Tile / VMEM planning helpers
# ---------------------------------------------------------------------------
_MIN_SUBLANE = {4: 8, 2: 16, 1: 32}   # dtype-aware minimum token-tile size


def _round_up(a, b):
    return ((a + b - 1) // b) * b


def _cdiv(a, b):
    return (a + b - 1) // b


def _tpu_vmem_and_cores():
    """Physical VMEM bytes and TensorCore count (defensive; safe fallbacks)."""
    cap, cores = None, 1
    try:
        info = pltpu.get_tpu_info()
        cap = getattr(info, "vmem_capacity_bytes", None)
        for name in ("num_tensorcores", "num_cores", "cores_per_chip",
                     "tensorcore_count"):
            v = getattr(info, name, None)
            if isinstance(v, int) and v > 0:
                cores = v
                break
    except Exception:
        pass
    if not cap:
        cap = 64 * 1024 * 1024     # conservative: v7x physical VMEM
    return int(cap), int(cores)


def _tile_vmem_bytes(tm, ti, H, itemsize):
    """Estimated VMEM working set of one grid step (double-buffered blocks)."""
    b = 2 * tm * H * itemsize            # x tile
    b += 2 * 3 * H * ti * itemsize       # gate / up / down weight tiles
    b += 2 * tm * H * itemsize           # output tile
    b += tm * H * 4                      # f32 accumulator scratch
    b += 3 * tm * ti * 4                 # gate / up / silu*up f32 temporaries
    return b


def _ti_candidates(I, ti_target):
    if I % 128 != 0:
        return [I]                       # small / unaligned I: full-dim block
    hi = max(128, min(_round_up(ti_target, 128), I))
    cands = [c for c in range(hi, 0, -128) if I % c == 0]
    return cands or [I]


def _select_tiles(M, H, I, itemsize, budget, tm_target, ti_target, n_tc):
    sub = _MIN_SUBLANE.get(itemsize, 8)
    M_sub = _round_up(max(M, 1), sub)

    tm = max(sub, min(_round_up(tm_target, sub), M_sub))
    ti_cands = _ti_candidates(I, ti_target)

    # Shrink ti first (weight re-streaming depends on tm, not ti), then tm,
    # until the double-buffered working set fits the VMEM budget.
    while True:
        ti = next((c for c in ti_cands
                   if _tile_vmem_bytes(tm, c, H, itemsize) <= budget), None)
        if ti is not None or tm <= sub:
            if ti is None:
                ti = ti_cands[-1]
            break
        tm = max(sub, _round_up(max(tm // 2, sub), sub))

    # Balance the M tiles: same tile count, no big pad tail; on multi-core
    # chips make sure a small (decode-size) batch still yields >= n_tc tiles.
    n_m = _cdiv(M_sub, tm)
    if n_tc > 1 and n_m < n_tc and M_sub >= n_tc * sub:
        n_m = n_tc
    tm = _round_up(_cdiv(M_sub, n_m), sub)
    M_pad = _round_up(M_sub, tm)
    return tm, ti, M_pad


# ---------------------------------------------------------------------------
# Wrapper
# ---------------------------------------------------------------------------
def llama_mlp(x, wg_t, wu_t, wd_t, *, tm_target=1024, ti_target=512,
              compute_dtype=None):
    """x: [B, S, H]; wg_t/wu_t: [H, I]; wd_t: [I, H]. Returns [B, S, H].

    compute_dtype: optionally cast operands (e.g. jnp.bfloat16) so the MXU
    runs its native low-precision path; accumulation stays f32 either way.
    """
    B, S, H = x.shape
    Hw, I = wg_t.shape
    assert Hw == H and wu_t.shape == (H, I) and wd_t.shape == (I, H)

    if compute_dtype is not None:
        x = x.astype(compute_dtype)
        wg_t = wg_t.astype(compute_dtype)
        wu_t = wu_t.astype(compute_dtype)
        wd_t = wd_t.astype(compute_dtype)

    itemsize = jnp.dtype(x.dtype).itemsize
    M = B * S
    x2 = x.reshape(M, H)

    vmem_cap, n_tc = _tpu_vmem_and_cores()
    vmem_limit = max(32 * 1024 * 1024, int(0.85 * vmem_cap))
    budget = int(0.70 * vmem_limit)      # headroom for compiler scratch

    tm, ti, M_pad = _select_tiles(M, H, I, itemsize, budget,
                                  tm_target, ti_target, n_tc)

    if M_pad != M:
        # Only hit for M not aligned to the (small, balanced) token tile.
        x2 = jnp.pad(x2, ((0, M_pad - M), (0, 0)))

    grid = (M_pad // tm, I // ti)

    cost = pl.CostEstimate(
        flops=6 * M * H * I,                                    # 3 matmuls
        transcendentals=M * I,                                  # sigmoid
        bytes_accessed=3 * H * I * itemsize * (M_pad // tm)     # weight streams
        + 2 * M_pad * H * itemsize,                             # x read + out write
    )

    out = pl.pallas_call(
        llama_mlp_kernel,
        out_shape=jax.ShapeDtypeStruct((M_pad, H), x.dtype),
        grid_spec=pltpu.PrefetchScalarGridSpec(
            num_scalar_prefetch=0,
            grid=grid,
            in_specs=[
                pl.BlockSpec((tm, H), lambda i, j: (i, 0)),   # x tile
                pl.BlockSpec((H, ti), lambda i, j: (0, j)),   # gate weight cols
                pl.BlockSpec((H, ti), lambda i, j: (0, j)),   # up weight cols
                pl.BlockSpec((ti, H), lambda i, j: (j, 0)),   # down weight rows
            ],
            out_specs=pl.BlockSpec((tm, H), lambda i, j: (i, 0)),
            scratch_shapes=[pltpu.VMEM((tm, H), jnp.float32)],
        ),
        compiler_params=pltpu.CompilerParams(
            dimension_semantics=("parallel", "arbitrary"),
            vmem_limit_bytes=vmem_limit,
        ),
        cost_estimate=cost,
    )(x2, wg_t, wu_t, wd_t)

    if M_pad != M:
        out = out[:M]
    return out.reshape(B, S, H)


def llama_mlp_ref(x, wg_t, wu_t, wd_t):
    g = x @ wg_t
    u = x @ wu_t
    return (g * jax.nn.sigmoid(g) * u) @ wd_t


# TODO(synk): the pretraining_tp > 1 branch of the PyTorch module is a sliced
# re-expression of the same math (identical result for tp == 1 weights); only
# the fused tp == 1 forward is implemented here.

if __name__ == "__main__":
    key = jax.random.PRNGKey(0)
    kx, kg, ku, kd = jax.random.split(key, 4)

    # 1) Small module-consistent shapes: batch=2, seq=8, hidden=32, intermediate=64
    B, S, H, I = 2, 8, 32, 64
    x = jax.random.normal(kx, (B, S, H), dtype=jnp.float32)
    wg_t = jax.random.normal(kg, (H, I), dtype=jnp.float32) * (1.0 / H ** 0.5)
    wu_t = jax.random.normal(ku, (H, I), dtype=jnp.float32) * (1.0 / H ** 0.5)
    wd_t = jax.random.normal(kd, (I, H), dtype=jnp.float32) * (1.0 / I ** 0.5)

    out = jax.block_until_ready(llama_mlp(x, wg_t, wu_t, wd_t))
    ref = llama_mlp_ref(x, wg_t, wu_t, wd_t)
    assert out.shape == (B, S, H)
    assert jnp.allclose(out, ref, atol=1e-4, rtol=1e-4), "mismatch vs reference"

    # 2) Ragged token count (exercises the pad/slice path, M=15 not tile-aligned).
    xr = jax.random.normal(kx, (3, 5, H), dtype=jnp.float32)
    out_r = jax.block_until_ready(llama_mlp(xr, wg_t, wu_t, wd_t))
    ref_r = llama_mlp_ref(xr, wg_t, wu_t, wd_t)
    assert jnp.allclose(out_r, ref_r, atol=1e-4, rtol=1e-4), "ragged mismatch"

    # 3) Multi-tile grid (exercises the I-axis accumulator, fused epilogue and
    #    multiple token tiles) at small scale via explicit tile targets.
    H2, I2 = 64, 256
    x2 = jax.random.normal(kx, (2, 32, H2), dtype=jnp.float32)
    wg2 = jax.random.normal(kg, (H2, I2), dtype=jnp.float32) * (1.0 / H2 ** 0.5)
    wu2 = jax.random.normal(ku, (H2, I2), dtype=jnp.float32) * (1.0 / H2 ** 0.5)
    wd2 = jax.random.normal(kd, (I2, H2), dtype=jnp.float32) * (1.0 / I2 ** 0.5)
    out2 = jax.block_until_ready(
        llama_mlp(x2, wg2, wu2, wd2, tm_target=32, ti_target=128))
    ref2 = llama_mlp_ref(x2, wg2, wu2, wd2)
    assert jnp.allclose(out2, ref2, atol=1e-4, rtol=1e-4), "multi-tile mismatch"

    print("KERNEL_OK")
</pallas_src>

<mosaic_0001>
module attributes {stable_mosaic.version = 11 : i64} {
  func.func @llama_mlp_kernel(%arg0: i32, %arg1: i32, %arg2: memref<16x32xf32, #tpu.memory_space<vmem>>, %arg3: memref<32x64xf32, #tpu.memory_space<vmem>>, %arg4: memref<32x64xf32, #tpu.memory_space<vmem>>, %arg5: memref<64x32xf32, #tpu.memory_space<vmem>>, %arg6: memref<16x32xf32, #tpu.memory_space<vmem>>, %arg7: memref<16x32xf32, #tpu.memory_space<vmem>>) attributes {dimension_semantics = [#tpu.dimension_semantics<parallel>, #tpu.dimension_semantics<arbitrary>], iteration_bounds = array<i64: 1, 1>, scalar_prefetch = 0 : i64, scratch_operands = 1 : i64, tpu.core_type = #tpu.core_type<tc>, window_params = [{transform_indices = @transform_0, window_bounds = array<i64: 16, 32>}, {transform_indices = @transform_1, window_bounds = array<i64: 32, 64>}, {transform_indices = @transform_2, window_bounds = array<i64: 32, 64>}, {transform_indices = @transform_3, window_bounds = array<i64: 64, 32>}, {transform_indices = @transform_4, window_bounds = array<i64: 16, 32>}]} {
    %c0_i32 = arith.constant 0 : i32
    %0 = arith.cmpi eq, %arg1, %c0_i32 : i32
    %1 = arith.extui %0 : i1 to i32
    %c0_i32_0 = arith.constant 0 : i32
    %2 = arith.cmpi ne, %1, %c0_i32_0 : i32
    scf.if %2 {
      %cst_15 = arith.constant 0.000000e+00 : f32
      %23 = vector.broadcast %cst_15 : f32 to vector<16x32xf32>
      %c0_16 = arith.constant 0 : index
      %c0_17 = arith.constant 0 : index
      %24 = vector.load %arg7[%c0_16, %c0_17] : memref<16x32xf32, #tpu.memory_space<vmem>>, vector<16x32xf32>
      tpu.vector_store %arg7[%c0_16, %c0_17], %23 {strides = array<i32>} : memref<16x32xf32, #tpu.memory_space<vmem>>, vector<16x32xf32>,
    } else {
    }
    %c0 = arith.constant 0 : index
    %c0_1 = arith.constant 0 : index
    %3 = vector.load %arg2[%c0, %c0_1] : memref<16x32xf32, #tpu.memory_space<vmem>>, vector<16x32xf32>
    %c0_2 = arith.constant 0 : index
    %c0_3 = arith.constant 0 : index
    %4 = vector.load %arg3[%c0_2, %c0_3] : memref<32x64xf32, #tpu.memory_space<vmem>>, vector<32x64xf32>
    %cst = arith.constant dense<0.000000e+00> : vector<16x64xf32>
    %5 = tpu.matmul %3, %4, %cst {dimension_numbers = #tpu.dot_dimension_numbers<[1], [0], [0], [1], [0, 0, 1, 1], [], []>} : vector<16x32xf32>, vector<32x64xf32>, vector<16x64xf32> -> vector<16x64xf32>
    %c0_4 = arith.constant 0 : index
    %c0_5 = arith.constant 0 : index
    %6 = vector.load %arg4[%c0_4, %c0_5] : memref<32x64xf32, #tpu.memory_space<vmem>>, vector<32x64xf32>
    %cst_6 = arith.constant dense<0.000000e+00> : vector<16x64xf32>
    %7 = tpu.matmul %3, %6, %cst_6 {dimension_numbers = #tpu.dot_dimension_numbers<[1], [0], [0], [1], [0, 0, 1, 1], [], []>} : vector<16x32xf32>, vector<32x64xf32>, vector<16x64xf32> -> vector<16x64xf32>
    %8 = arith.negf %5 : vector<16x64xf32>
    %9 = math.exp %8 : vector<16x64xf32>
    %cst_7 = arith.constant 1.000000e+00 : f32
    %10 = vector.broadcast %cst_7 : f32 to vector<16x64xf32>
    %11 = arith.addf %10, %9 : vector<16x64xf32>
    %12 = arith.divf %10, %11 : vector<16x64xf32>
    %13 = arith.mulf %5, %12 : vector<16x64xf32>
    %14 = arith.mulf %13, %7 : vector<16x64xf32>
    %c0_8 = arith.constant 0 : index
    %c0_9 = arith.constant 0 : index
    %15 = vector.load %arg5[%c0_8, %c0_9] : memref<64x32xf32, #tpu.memory_space<vmem>>, vector<64x32xf32>
    %cst_10 = arith.constant dense<0.000000e+00> : vector<16x32xf32>
    %16 = tpu.matmul %14, %15, %cst_10 {dimension_numbers = #tpu.dot_dimension_numbers<[1], [0], [0], [1], [0, 0, 1, 1], [], []>} : vector<16x64xf32>, vector<64x32xf32>, vector<16x32xf32> -> vector<16x32xf32>
    %c0_i32_11 = arith.constant 0 : i32
    %17 = arith.cmpi slt, %arg1, %c0_i32_11 : i32
    %18 = arith.extui %17 : i1 to i32
    %c0_i32_12 = arith.constant 0 : i32
    %19 = arith.cmpi ne, %18, %c0_i32_12 : i32
    scf.if %19 {
      %c0_15 = arith.constant 0 : index
      %c0_16 = arith.constant 0 : index
      %23 = vector.load %arg7[%c0_15, %c0_16] : memref<16x32xf32, #tpu.memory_space<vmem>>, vector<16x32xf32>
      %24 = arith.addf %23, %16 : vector<16x32xf32>
      %c0_17 = arith.constant 0 : index
      %c0_18 = arith.constant 0 : index
      %25 = vector.load %arg7[%c0_17, %c0_18] : memref<16x32xf32, #tpu.memory_space<vmem>>, vector<16x32xf32>
      tpu.vector_store %arg7[%c0_17, %c0_18], %24 {strides = array<i32>} : memref<16x32xf32, #tpu.memory_space<vmem>>, vector<16x32xf32>,
    } else {
    }
    %c0_i32_13 = arith.constant 0 : i32
    %20 = arith.cmpi eq, %arg1, %c0_i32_13 : i32
    %21 = arith.extui %20 : i1 to i32
    %c0_i32_14 = arith.constant 0 : i32
    %22 = arith.cmpi ne, %21, %c0_i32_14 : i32
    scf.if %22 {
      %c0_15 = arith.constant 0 : index
      %c0_16 = arith.constant 0 : index
      %23 = vector.load %arg7[%c0_15, %c0_16] : memref<16x32xf32, #tpu.memory_space<vmem>>, vector<16x32xf32>
      %24 = arith.addf %23, %16 : vector<16x32xf32>
      %c0_17 = arith.constant 0 : index
      %c0_18 = arith.constant 0 : index
      %25 = vector.load %arg6[%c0_17, %c0_18] : memref<16x32xf32, #tpu.memory_space<vmem>>, vector<16x32xf32>
      tpu.vector_store %arg6[%c0_17, %c0_18], %24 {strides = array<i32>} : memref<16x32xf32, #tpu.memory_space<vmem>>, vector<16x32xf32>,
    } else {
    }
    return
  }
  func.func @transform_0(%arg0: i32, %arg1: i32) -> (i32, i32) {
    %c0_i32 = arith.constant 0 : i32
    %c0_i32_0 = arith.constant 0 : i32
    return %arg0, %c0_i32 : i32, i32
  }
  func.func @transform_1(%arg0: i32, %arg1: i32) -> (i32, i32) {
    %c0_i32 = arith.constant 0 : i32
    %c0_i32_0 = arith.constant 0 : i32
    return %c0_i32, %arg1 : i32, i32
  }
  func.func @transform_2(%arg0: i32, %arg1: i32) -> (i32, i32) {
    %c0_i32 = arith.constant 0 : i32
    %c0_i32_0 = arith.constant 0 : i32
    return %c0_i32, %arg1 : i32, i32
  }
  func.func @transform_3(%arg0: i32, %arg1: i32) -> (i32, i32) {
    %c0_i32 = arith.constant 0 : i32
    %c0_i32_0 = arith.constant 0 : i32
    return %arg1, %c0_i32 : i32, i32
  }
  func.func @transform_4(%arg0: i32, %arg1: i32) -> (i32, i32) {
    %c0_i32 = arith.constant 0 : i32
    %c0_i32_0 = arith.constant 0 : i32
    return %arg0, %c0_i32 : i32, i32
  }
}

</mosaic_0001>

<llo_original>
// kernel: tpu_custom_call.1
$region0: #{tpu_custom_call.1}
  #allocation0 [shape = 'u32[]', space=smem, size = 0x4, offset = 0x4, fixed_abs, tag = 'smem constant byte address 0x4 - core index']
  #allocation1 [shape = 'u32[144,128]{1,0:T(1,128)}', space=vmem, size = 0x12000, scoped, tag = 'internal scratch']
  #allocation2 [shape = 'f32[16,32]{1,0:T(8,128)}', space=vmem, size = 0x2000, scoped, tag = 'scratch operand']
  %s0 = inlined_call_operand.vmem [shape: f32[16,32], index: 0, kind: input, shape index: {}]
  %s1 = inlined_call_operand.vmem [shape: f32[32,64], index: 1, kind: input, shape index: {}]
  %s2 = inlined_call_operand.vmem [shape: f32[32,64], index: 2, kind: input, shape index: {}]
  %s3 = inlined_call_operand.vmem [shape: f32[64,32], index: 3, kind: input, shape index: {}]
  %s4 = inlined_call_operand.hbm [shape: f32[16,32], index: 4, kind: output, shape index: {}]
  %s5 = sld [smem:[#allocation0]]
  $region38: #{tpu_custom_call.1} parent=0
    _
  %s7 = ssub.s32 1, %s5
  %s8 = scalar_select 0, %s7, %s5
  $region1: #{tpu_custom_call.1} parent=0
    #allocation3 [shape = 'u8[8192]{0}', space=vmem, size = 0x2000, scoped, tag = 'output window, operand 0, single buffered']
    #allocation4 [shape = 's32[1]{0}', space=sflag, size = 0x4, scoped, tag = 'scoped memory for tpu_custom_call.1']
    %9 = vsyncpa [#allocation4], 0
    // Predicated region
    $region2: #{tpu_custom_call.1} parent=1 // pred_check
      _
    $region3: #{tpu_custom_call.1} parent=1 // pred_check_branch
      %11 = sbr.rel (0) target = $region5
    $region4: #{tpu_custom_call.1} parent=1 // pred_region
      _
    $region5: #{tpu_custom_call.1} parent=1 // pred_fallthru
      _
    // Predicated region
    $region6: #{tpu_custom_call.1} parent=1 // pred_check
      _
    $region7: #{tpu_custom_call.1} parent=1 // pred_check_branch
      %13 = sbr.rel (0) target = $region9
    $region8: #{tpu_custom_call.1} parent=1 // pred_region
      _
    $region9: #{tpu_custom_call.1} parent=1 // pred_fallthru
      _
    // Predicated region
    $region10: #{tpu_custom_call.1} parent=1 // pred_check
      _
    $region11: #{tpu_custom_call.1} parent=1 // pred_check_branch
      %15 = sbr.rel (0) target = $region13
    $region12: #{tpu_custom_call.1} parent=1 // pred_region
      _
    $region13: #{tpu_custom_call.1} parent=1 // pred_fallthru
      _
    // Predicated region
    $region14: #{tpu_custom_call.1} parent=1 // pred_check
      _
    $region15: #{tpu_custom_call.1} parent=1 // pred_check_branch
      %17 = sbr.rel (0) target = $region17
    $region16: #{tpu_custom_call.1} parent=1 // pred_region
      _
    $region17: #{tpu_custom_call.1} parent=1 // pred_fallthru
      _
    %p18 = scmp.eq.s32.totalorder 0, 0
    // Predicated region
    $region18: #{tpu_custom_call.1} parent=1 // pred_check
      %p19 = pneg %p18
    $region19: #{tpu_custom_call.1} parent=1 // pred_check_branch
      %21 = sbr.rel (%p19) target = $region21
    $region20: #{tpu_custom_call.1} parent=1 // pred_region
      %vm22 = vcmask 261120
      %23 = vst.msk [vmem:[#allocation2] sm:$0xff] %vm22, 0.0
      %24 = vst.msk [vmem:[#allocation2 + $0x8] sm:$0xff] %vm22, 0.0
    $region21: #{tpu_custom_call.1} parent=1 // pred_fallthru
      _
    %v25 = vld [vmem:[%s0] sm:$0xff]
    %v26 = vld [vmem:[%s0 + $0x8] sm:$0xff]
    %v27 = vld [vmem:[%s1] sm:$0xff]
    %v28 = vld [vmem:[%s1 + $0x8] sm:$0xff]
    %v29 = vld [vmem:[%s1 + $0x10] sm:$0xff]
    %v30 = vld [vmem:[%s1 + $0x18] sm:$0xff]
    %vm31 = vcmask 261120
    %v33 = vsel %vm31, %v25, 0
    %v36 = vsel %vm31, %v26, 0
    %38 = vmatprep.subr.mxu0 0.0
    %39 = vmatpush1.msra.mxu0 0.0
    %40 = vmatprep.subr.mxu0 0.0
    %41 = vmatpush1.msra.mxu0 0.0
    %42 = vmatprep.subr.mxu0 0.0
    %43 = vmatpush1.msra.mxu0 0.0
    %44 = vmatprep.subr.mxu0 0.0
    %45 = vmatpush1.msra.mxu0 0.0
    %46 = vmatprep.subr.mxu0 0.0
    %47 = vmatpush1.msra.mxu0 0.0
    %48 = vmatprep.subr.mxu0 0.0
    %49 = vmatpush1.msra.mxu0 0.0
    %50 = vmatprep.subr.mxu0 0.0
    %51 = vmatpush1.msra.mxu0 0.0
    %52 = vmatprep.subr.mxu0 0.0
    %53 = vmatpush1.msra.mxu0 0.0
    %54 = vmatprep.subr.mxu0 0.0
    %55 = vmatpush1.msra.mxu0 0.0
    %56 = vmatprep.subr.mxu0 0.0
    %57 = vmatpush1.msra.mxu0 0.0
    %58 = vmatprep.subr.mxu0 0.0
    %59 = vmatpush1.msra.mxu0 0.0
    %60 = vmatprep.subr.mxu0 0.0
    %61 = vmatpush1.msra.mxu0 0.0
    %62 = vmatprep.subr.mxu0 0.0
    %63 = vmatpush1.msra.mxu0 %v30
    %64 = vmatprep.subr.mxu0 0.0
    %65 = vmatpush1.msra.mxu0 %v29
    %66 = vmatprep.subr.mxu0 0.0
    %67 = vmatpush1.msra.mxu0 %v28
    %68 = vmatprep.subr.mxu0 0.0
    %69 = vmatpush1.msra.mxu0 %v27
    %70 = vmatprep.subr.mxu0 0.0
    %71 = vmatpush2.msra.mxu0 0.0
    %72 = vmatprep.subr.mxu0 0.0
    %73 = vmatpush2.msra.mxu0 0.0
    %74 = vmatprep.subr.mxu0 0.0
    %75 = vmatpush2.msra.mxu0 0.0
    %76 = vmatprep.subr.mxu0 0.0
    %77 = vmatpush2.msra.mxu0 0.0
    %78 = vmatprep.subr.mxu0 0.0
    %79 = vmatpush2.msra.mxu0 0.0
    %80 = vmatprep.subr.mxu0 0.0
    %81 = vmatpush2.msra.mxu0 0.0
    %82 = vmatprep.subr.mxu0 0.0
    %83 = vmatpush2.msra.mxu0 0.0
    %84 = vmatprep.subr.mxu0 0.0
    %85 = vmatpush2.msra.mxu0 0.0
    %86 = vmatprep.subr.mxu0 0.0
    %87 = vmatpush2.msra.mxu0 0.0
    %88 = vmatprep.subr.mxu0 0.0
    %89 = vmatpush2.msra.mxu0 0.0
    %90 = vmatprep.subr.mxu0 0.0
    %91 = vmatpush2.msra.mxu0 0.0
    %92 = vmatprep.subr.mxu0 0.0
    %93 = vmatpush2.msra.mxu0 0.0
    %94 = vmatprep.subr.mxu0 0.0
    %95 = vmatpush2.msra.mxu0 0.0
    %96 = vmatprep.subr.mxu0 0.0
    %97 = vmatpush2.msra.mxu0 0.0
    %98 = vmatprep.subr.mxu0 0.0
    %99 = vmatpush2.msra.mxu0 0.0
    %100 = vmatprep.subr.mxu0 0.0
    %101 = vmatpush2.msra.mxu0 0.0
    %102 = vmatprep.mubr.f32.mxu0 0.0
    %103 = vmatmul.mubr.f32.gmra.mxu0 %v33
    %v104 = vpop.f32.mrf.mxu0
    %v105 = vadd.f32 0.0, %v104
    %v106 = vpop.f32.mrf.mxu0
    %107 = vmatprep.mubr.f32.mxu0 0.0
    %108 = vmatmul.mubr.f32.gmra.mxu0 %v36
    %v109 = vpop.f32.mrf.mxu0
    %v110 = vadd.f32 0.0, %v109
    %v111 = vpop.f32.mrf.mxu0
    %112 = vdwg.mxu0
    %v113 = vld [vmem:[%s2] sm:$0xff]
    %v114 = vld [vmem:[%s2 + $0x8] sm:$0xff]
    %v115 = vld [vmem:[%s2 + $0x10] sm:$0xff]
    %v116 = vld [vmem:[%s2 + $0x18] sm:$0xff]
    %117 = vmatprep.subr.mxu0 0.0
    %118 = vmatpush1.msra.mxu0 0.0
    %119 = vmatprep.subr.mxu0 0.0
    %120 = vmatpush1.msra.mxu0 0.0
    %121 = vmatprep.subr.mxu0 0.0
    %122 = vmatpush1.msra.mxu0 0.0
    %123 = vmatprep.subr.mxu0 0.0
    %124 = vmatpush1.msra.mxu0 0.0
    %125 = vmatprep.subr.mxu0 0.0
    %126 = vmatpush1.msra.mxu0 0.0
    %127 = vmatprep.subr.mxu0 0.0
    %128 = vmatpush1.msra.mxu0 0.0
    %129 = vmatprep.subr.mxu0 0.0
    %130 = vmatpush1.msra.mxu0 0.0
    %131 = vmatprep.subr.mxu0 0.0
    %132 = vmatpush1.msra.mxu0 0.0
    %133 = vmatprep.subr.mxu0 0.0
    %134 = vmatpush1.msra.mxu0 0.0
    %135 = vmatprep.subr.mxu0 0.0
    %136 = vmatpush1.msra.mxu0 0.0
    %137 = vmatprep.subr.mxu0 0.0
    %138 = vmatpush1.msra.mxu0 0.0
    %139 = vmatprep.subr.mxu0 0.0
    %140 = vmatpush1.msra.mxu0 0.0
    %141 = vmatprep.subr.mxu0 0.0
    %142 = vmatpush1.msra.mxu0 %v116
    %143 = vmatprep.subr.mxu0 0.0
    %144 = vmatpush1.msra.mxu0 %v115
    %145 = vmatprep.subr.mxu0 0.0
    %146 = vmatpush1.msra.mxu0 %v114
    %147 = vmatprep.subr.mxu0 0.0
    %148 = vmatpush1.msra.mxu0 %v113
    %149 = vmatprep.subr.mxu0 0.0
    %150 = vmatpush2.msra.mxu0 0.0
    %151 = vmatprep.subr.mxu0 0.0
    %152 = vmatpush2.msra.mxu0 0.0
    %153 = vmatprep.subr.mxu0 0.0
    %154 = vmatpush2.msra.mxu0 0.0
    %155 = vmatprep.subr.mxu0 0.0
    %156 = vmatpush2.msra.mxu0 0.0
    %157 = vmatprep.subr.mxu0 0.0
    %158 = vmatpush2.msra.mxu0 0.0
    %159 = vmatprep.subr.mxu0 0.0
    %160 = vmatpush2.msra.mxu0 0.0
    %161 = vmatprep.subr.mxu0 0.0
    %162 = vmatpush2.msra.mxu0 0.0
    %163 = vmatprep.subr.mxu0 0.0
    %164 = vmatpush2.msra.mxu0 0.0
    %165 = vmatprep.subr.mxu0 0.0
    %166 = vmatpush2.msra.mxu0 0.0
    %167 = vmatprep.subr.mxu0 0.0
    %168 = vmatpush2.msra.mxu0 0.0
    %169 = vmatprep.subr.mxu0 0.0
    %170 = vmatpush2.msra.mxu0 0.0
    %171 = vmatprep.subr.mxu0 0.0
    %172 = vmatpush2.msra.mxu0 0.0
    %173 = vmatprep.subr.mxu0 0.0
    %174 = vmatpush2.msra.mxu0 0.0
    %175 = vmatprep.subr.mxu0 0.0
    %176 = vmatpush2.msra.mxu0 0.0
    %177 = vmatprep.subr.mxu0 0.0
    %178 = vmatpush2.msra.mxu0 0.0
    %179 = vmatprep.subr.mxu0 0.0
    %180 = vmatpush2.msra.mxu0 0.0
    %181 = vmatprep.mubr.f32.mxu0 0.0
    %182 = vmatmul.mubr.f32.gmra.mxu0 %v33
    %v183 = vpop.f32.mrf.mxu0
    %v184 = vadd.f32 0.0, %v183
    %v185 = vpop.f32.mrf.mxu0
    %186 = vmatprep.mubr.f32.mxu0 0.0
    %187 = vmatmul.mubr.f32.gmra.mxu0 %v36
    %v188 = vpop.f32.mrf.mxu0
    %v189 = vadd.f32 0.0, %v188
    %v190 = vpop.f32.mrf.mxu0
    %191 = vdwg.mxu0
    %v192 = vxor.u32 %v105, 2147483648
    %v193 = vxor.u32 %v110, 2147483648
    %v194 = vmul.f32 %v192, 1.442695
    %v195 = vpow.pop %v194
    %v196 = vmul.f32 %v193, 1.442695
    %v197 = vpow.pop %v196
    %v198 = vadd.f32 %v195, 1.0
    %v199 = vadd.f32 %v197, 1.0
    %v200 = vrcp.pop %v198
    %v201 = vmul.f32 1.0, %v200
    %v202 = vrcp.pop %v199
    %v203 = vmul.f32 1.0, %v202
    %v204 = vmul.f32 %v105, %v201
    %v205 = vmul.f32 %v110, %v203
    %v206 = vmul.f32 %v204, %v184
    %v207 = vmul.f32 %v205, %v189
    %v208 = vld [vmem:[%s3] sm:$0xff]
    %v209 = vld [vmem:[%s3 + $0x8] sm:$0xff]
    %v210 = vld [vmem:[%s3 + $0x10] sm:$0xff]
    %v211 = vld [vmem:[%s3 + $0x18] sm:$0xff]
    %v212 = vld [vmem:[%s3 + $0x20] sm:$0xff]
    %v213 = vld [vmem:[%s3 + $0x28] sm:$0xff]
    %v214 = vld [vmem:[%s3 + $0x30] sm:$0xff]
    %v215 = vld [vmem:[%s3 + $0x38] sm:$0xff]
    %vm216 = vcmask 523264
    %v218 = vsel %vm216, %v206, 0
    %v221 = vsel %vm216, %v207, 0
    %223 = vmatprep.subr.mxu0 0.0
    %224 = vmatpush1.msra.mxu0 0.0
    %225 = vmatprep.subr.mxu0 0.0
    %226 = vmatpush1.msra.mxu0 0.0
    %227 = vmatprep.subr.mxu0 0.0
    %228 = vmatpush1.msra.mxu0 0.0
    %229 = vmatprep.subr.mxu0 0.0
    %230 = vmatpush1.msra.mxu0 0.0
    %231 = vmatprep.subr.mxu0 0.0
    %232 = vmatpush1.msra.mxu0 0.0
    %233 = vmatprep.subr.mxu0 0.0
    %234 = vmatpush1.msra.mxu0 0.0
    %235 = vmatprep.subr.mxu0 0.0
    %236 = vmatpush1.msra.mxu0 0.0
    %237 = vmatprep.subr.mxu0 0.0
    %238 = vmatpush1.msra.mxu0 0.0
    %239 = vmatprep.subr.mxu0 0.0
    %240 = vmatpush1.msra.mxu0 %v215
    %241 = vmatprep.subr.mxu0 0.0
    %242 = vmatpush1.msra.mxu0 %v214
    %243 = vmatprep.subr.mxu0 0.0
    %244 = vmatpush1.msra.mxu0 %v213
    %245 = vmatprep.subr.mxu0 0.0
    %246 = vmatpush1.msra.mxu0 %v212
    %247 = vmatprep.subr.mxu0 0.0
    %248 = vmatpush1.msra.mxu0 %v211
    %249 = vmatprep.subr.mxu0 0.0
    %250 = vmatpush1.msra.mxu0 %v210
    %251 = vmatprep.subr.mxu0 0.0
    %252 = vmatpush1.msra.mxu0 %v209
    %253 = vmatprep.subr.mxu0 0.0
    %254 = vmatpush1.msra.mxu0 %v208
    %255 = vmatprep.subr.mxu0 0.0
    %256 = vmatpush2.msra.mxu0 0.0
    %257 = vmatprep.subr.mxu0 0.0
    %258 = vmatpush2.msra.mxu0 0.0
    %259 = vmatprep.subr.mxu0 0.0
    %260 = vmatpush2.msra.mxu0 0.0
    %261 = vmatprep.subr.mxu0 0.0
    %262 = vmatpush2.msra.mxu0 0.0
    %263 = vmatprep.subr.mxu0 0.0
    %264 = vmatpush2.msra.mxu0 0.0
    %265 = vmatprep.subr.mxu0 0.0
    %266 = vmatpush2.msra.mxu0 0.0
    %267 = vmatprep.subr.mxu0 0.0
    %268 = vmatpush2.msra.mxu0 0.0
    %269 = vmatprep.subr.mxu0 0.0
    %270 = vmatpush2.msra.mxu0 0.0
    %271 = vmatprep.subr.mxu0 0.0
    %272 = vmatpush2.msra.mxu0 0.0
    %273 = vmatprep.subr.mxu0 0.0
    %274 = vmatpush2.msra.mxu0 0.0
    %275 = vmatprep.subr.mxu0 0.0
    %276 = vmatpush2.msra.mxu0 0.0
    %277 = vmatprep.subr.mxu0 0.0
    %278 = vmatpush2.msra.mxu0 0.0
    %279 = vmatprep.subr.mxu0 0.0
    %280 = vmatpush2.msra.mxu0 0.0
    %281 = vmatprep.subr.mxu0 0.0
    %282 = vmatpush2.msra.mxu0 0.0
    %283 = vmatprep.subr.mxu0 0.0
    %284 = vmatpush2.msra.mxu0 0.0
    %285 = vmatprep.subr.mxu0 0.0
    %286 = vmatpush2.msra.mxu0 0.0
    %287 = vmatprep.mubr.f32.mxu0 0.0
    %288 = vmatmul.mubr.f32.gmra.mxu0 %v218
    %v289 = vpop.f32.mrf.mxu0
    %v290 = vadd.f32 0.0, %v289
    %v291 = vpop.f32.mrf.mxu0
    %292 = vmatprep.mubr.f32.mxu0 0.0
    %293 = vmatmul.mubr.f32.gmra.mxu0 %v221
    %v294 = vpop.f32.mrf.mxu0
    %v295 = vadd.f32 0.0, %v294
    %v296 = vpop.f32.mrf.mxu0
    %297 = vdwg.mxu0
    %p298 = scmp.lt.s32.totalorder 0, 0
    // Predicated region
    $region22: #{tpu_custom_call.1} parent=1 // pred_check
      %p299 = pneg %p298
    $region23: #{tpu_custom_call.1} parent=1 // pred_check_branch
      %301 = sbr.rel (%p299) target = $region25
    $region24: #{tpu_custom_call.1} parent=1 // pred_region
      %v302 = vld [vmem:[#allocation2] sm:$0xff]
      %v303 = vld [vmem:[#allocation2 + $0x8] sm:$0xff]
      %v304 = vadd.f32 %v302, %v290
      %v305 = vadd.f32 %v303, %v295
      %306 = vst.msk [vmem:[#allocation2] sm:$0xff] %vm31, %v304
      %307 = vst.msk [vmem:[#allocation2 + $0x8] sm:$0xff] %vm31, %v305
    $region25: #{tpu_custom_call.1} parent=1 // pred_fallthru
      _
    // Predicated region
    $region26: #{tpu_custom_call.1} parent=1 // pred_check
      %p308 = pneg %p18
    $region27: #{tpu_custom_call.1} parent=1 // pred_check_branch
      %310 = sbr.rel (%p308) target = $region29
    $region28: #{tpu_custom_call.1} parent=1 // pred_region
      %v311 = vld [vmem:[#allocation2] sm:$0xff]
      %v312 = vld [vmem:[#allocation2 + $0x8] sm:$0xff]
      %v313 = vadd.f32 %v311, %v290
      %v314 = vadd.f32 %v312, %v295
      %315 = vst.msk [vmem:[#allocation3] sm:$0xff] %vm31, %v313
      %316 = vst.msk [vmem:[#allocation3 + $0x8] sm:$0xff] %vm31, %v314
    $region29: #{tpu_custom_call.1} parent=1 // pred_fallthru
      _
    // Predicated region
    $region30: #{tpu_custom_call.1} parent=1 // pred_check
      _
    $region31: #{tpu_custom_call.1} parent=1 // pred_check_branch
      %318 = sbr.rel (0) target = $region33
    $region32: #{tpu_custom_call.1} parent=1 // pred_region
      %s320 = ssub.s32 256, 256
      %321 = vsyncadd [#allocation4], %s320
      %s322 = sshll.u32 [#allocation3], 4
      %s323 = int_to_ptr.vmem [resolvable:$true] %s322
      %328 = dma.vmem_to_hbm [thread:$0]  %s323, 256, %s4, [#allocation4], 128, 128, 8
    $region33: #{tpu_custom_call.1} parent=1 // pred_fallthru
      _
    // Predicated region
    $region34: #{tpu_custom_call.1} parent=1 // pred_check
      _
    $region35: #{tpu_custom_call.1} parent=1 // pred_check_branch
      %330 = sbr.rel (0) target = $region37
    $region36: #{tpu_custom_call.1} parent=1 // pred_region
      %331 = dma.done [#allocation4], 256
    $region37: #{tpu_custom_call.1} parent=1 // pred_fallthru
      _
    %332 = vsyncpa [#allocation4], 1

</llo_original>
